<compile_context>
chip_gen: v5e
topology: v5e:2x2
jax: 0.10.0
libtpu: 0.0.40
codegen_flags: <defaults>
</compile_context>

<pallas_src>
import math
import functools

import jax
import jax.numpy as jnp
from jax import lax
from jax.experimental import pallas as pl
from jax.experimental.pallas import tpu as pltpu


def _hardsigmoid(x):
    # torch.nn.Hardsigmoid: clamp(x/6 + 1/2, 0, 1)
    return jnp.clip(x * (1.0 / 6.0) + 0.5, 0.0, 1.0)


def _timemix_kernel(
    # inputs
    x_ref, sx_ref, sA_ref, sB_ref, sp_ref,
    mix_ref,            # (3, C)  rows: [time_mix_k, time_mix_v, time_mix_r]
    wkv_ref,            # (2, TN) rows: [time_first, -exp(time_decay)]  (column tile)
    wk_ref, wv_ref, wr_ref,   # (C, TN) bf16 column tiles
    wo_ref,             # (TN, C) bf16 row (K) tile of the output projection
    # outputs
    rwkv_ref, oA_ref, oB_ref, op_ref,
):
    j = pl.program_id(0)
    f32 = jnp.float32

    x = x_ref[...]
    sx = sx_ref[...]

    mix = mix_ref[...]
    tmk = mix[0:1, :]
    tmv = mix[1:2, :]
    tmr = mix[2:3, :]

    xk = x * tmk + sx * (1.0 - tmk)
    xv = x * tmv + sx * (1.0 - tmv)
    xr = x * tmr + sx * (1.0 - tmr)

    # Weights arrive from HBM as bf16 (half the bandwidth); compute in f32 on the MXU.
    k = jnp.dot(xk, wk_ref[...].astype(f32), preferred_element_type=f32)
    v = jnp.dot(xv, wv_ref[...].astype(f32), preferred_element_type=f32)
    r = _hardsigmoid(jnp.dot(xr, wr_ref[...].astype(f32), preferred_element_type=f32))

    wkv = wkv_ref[...]
    time_first = wkv[0:1, :]
    neg_time_decay = wkv[1:2, :]        # precomputed -exp(time_decay)

    sA = sA_ref[...]
    sB = sB_ref[...]
    sp = sp_ref[...]

    # numerator/denominator for the current token (log-sum-exp form)
    ww = time_first + k
    p = jnp.maximum(sp, ww)
    e1 = jnp.exp(sp - p)
    e2 = jnp.exp(ww - p)
    a = e1 * sA + e2 * v
    b = e1 * sB + e2

    # state update
    ww2 = sp + neg_time_decay
    p2 = jnp.maximum(ww2, k)
    e1b = jnp.exp(ww2 - p2)
    e2b = jnp.exp(k - p2)
    oA_ref[...] = (e1b * sA + e2b * v).astype(oA_ref.dtype)
    oB_ref[...] = (e1b * sB + e2b).astype(oB_ref.dtype)
    op_ref[...] = p2.astype(op_ref.dtype)

    # output projection: this grid axis is the K (reduction) axis of W_out ->
    # accumulate into the VMEM-resident output block.
    rwkv_tile = r * a / b
    partial = jnp.dot(rwkv_tile, wo_ref[...].astype(f32), preferred_element_type=f32)

    @pl.when(j == 0)
    def _():
        rwkv_ref[...] = partial

    @pl.when(j > 0)
    def _():
        rwkv_ref[...] += partial


def _pick_tile(C):
    # lane-aligned column tile; whole array for small C
    if C > 512 and C % 512 == 0:
        return 512
    return C


@jax.jit
def rwkv_timemix_for_quant(x, state_A, state_B, state_p, state_x, params):
    """Returns (rwkv, new_A, new_B, new_p, new_x) — same as the torch module."""
    B, C = x.shape
    tn = _pick_tile(C)
    assert C % tn == 0 and (tn == C or tn % 128 == 0)
    grid = (C // tn,)

    in_specs = [
        pl.BlockSpec((B, C), lambda j: (0, 0)),      # x            (full, resident)
        pl.BlockSpec((B, C), lambda j: (0, 0)),      # state_x      (full, resident)
        pl.BlockSpec((B, tn), lambda j: (0, j)),     # state_A tile
        pl.BlockSpec((B, tn), lambda j: (0, j)),     # state_B tile
        pl.BlockSpec((B, tn), lambda j: (0, j)),     # state_p tile
        pl.BlockSpec((3, C), lambda j: (0, 0)),      # packed time-mix rows
        pl.BlockSpec((2, tn), lambda j: (0, j)),     # packed [time_first, -exp(time_decay)]
        pl.BlockSpec((C, tn), lambda j: (0, j)),     # W_key   column tile (bf16)
        pl.BlockSpec((C, tn), lambda j: (0, j)),     # W_value column tile (bf16)
        pl.BlockSpec((C, tn), lambda j: (0, j)),     # W_recept column tile (bf16)
        pl.BlockSpec((tn, C), lambda j: (j, 0)),     # W_out   K tile (bf16)
    ]
    out_specs = [
        pl.BlockSpec((B, C), lambda j: (0, 0)),      # rwkv (accumulated over grid)
        pl.BlockSpec((B, tn), lambda j: (0, j)),     # new_A
        pl.BlockSpec((B, tn), lambda j: (0, j)),     # new_B
        pl.BlockSpec((B, tn), lambda j: (0, j)),     # new_p
    ]
    out_shape = (
        jax.ShapeDtypeStruct((B, C), jnp.float32),
        jax.ShapeDtypeStruct((B, C), jnp.float32),
        jax.ShapeDtypeStruct((B, C), jnp.float32),
        jax.ShapeDtypeStruct((B, C), jnp.float32),
    )

    # conservative VMEM estimate (double-buffered blocks + margin), capped for v7x (64 MiB phys.)
    f32b, bf16b = 4, 2
    block_bytes = (
        2 * B * C * f32b            # x, state_x
        + 3 * B * tn * f32b         # state tiles in
        + 8 * C * f32b + 8 * tn * f32b   # packed param rows (sublane-padded to 8)
        + 3 * C * tn * bf16b        # wk/wv/wr tiles
        + tn * C * bf16b            # wo tile
        + B * C * f32b              # rwkv out
        + 3 * B * tn * f32b         # state tiles out
    )
    vmem_bytes = int(min(2 * block_bytes + (4 << 20), 48 << 20))

    rwkv, new_A, new_B, new_p = pl.pallas_call(
        _timemix_kernel,
        out_shape=out_shape,
        grid_spec=pltpu.PrefetchScalarGridSpec(
            num_scalar_prefetch=0,
            grid=grid,
            in_specs=in_specs,
            out_specs=out_specs,
        ),
        # states are updated in place
        input_output_aliases={2: 1, 3: 2, 4: 3},
        compiler_params=pltpu.CompilerParams(
            dimension_semantics=("arbitrary",),      # grid axis is a reduction for W_out
            vmem_limit_bytes=vmem_bytes,
        ),
    )(
        x, state_x, state_A, state_B, state_p,
        params["mix_rows"], params["wkv_rows"],
        params["wk"], params["wv"], params["wr"], params["wo"],
    )
    # new_x = x exactly (no kernel output / no extra HBM traffic)
    return rwkv, new_A, new_B, new_p, x


def init_params(key, n_embed):
    """Synthetic params matching the torch module's shapes/semantics.
    Linear weights pre-transposed to [in, out] and stored as bf16 (weight-stream bandwidth)."""
    ks = jax.random.split(key, 7)

    def lin(k, fan_in, fan_out):
        bound = 1.0 / math.sqrt(fan_in)
        w = jax.random.uniform(k, (fan_out, fan_in), jnp.float32, -bound, bound)
        return w.T.astype(jnp.bfloat16)

    # torch init uses ones for the mix coefficients; use random in [0,1] here so the
    # state_x mixing path is actually exercised by the test.
    tmk = jax.random.uniform(ks[0], (1, n_embed), jnp.float32)
    tmv = jax.random.uniform(ks[1], (1, n_embed), jnp.float32)
    tmr = jax.random.uniform(ks[2], (1, n_embed), jnp.float32)
    time_decay = jnp.ones((1, n_embed), jnp.float32)               # torch.ones(n_embed)
    time_first = jnp.full((1, n_embed), math.log(0.3), jnp.float32)

    return dict(
        mix_rows=jnp.concatenate([tmk, tmv, tmr], axis=0),          # (3, C)
        wkv_rows=jnp.concatenate([time_first, -jnp.exp(time_decay)], axis=0),  # (2, C)
        wk=lin(ks[3], n_embed, n_embed),
        wv=lin(ks[4], n_embed, n_embed),
        wr=lin(ks[5], n_embed, n_embed),
        wo=lin(ks[6], n_embed, n_embed),
    )


def reference_timemix(x, sA, sB, sp, sx, params):
    """Pure-JAX reference with identical numerics (bf16-rounded weights, f32 math)."""
    f32 = jnp.float32
    hp = lax.Precision.HIGHEST
    mix = params["mix_rows"]
    tmk, tmv, tmr = mix[0:1], mix[1:2], mix[2:3]
    wkv = params["wkv_rows"]
    tf, ntd = wkv[0:1], wkv[1:2]
    wk = params["wk"].astype(f32)
    wv = params["wv"].astype(f32)
    wr = params["wr"].astype(f32)
    wo = params["wo"].astype(f32)

    xk = x * tmk + sx * (1 - tmk)
    xv = x * tmv + sx * (1 - tmv)
    xr = x * tmr + sx * (1 - tmr)
    k = jnp.dot(xk, wk, precision=hp)
    v = jnp.dot(xv, wv, precision=hp)
    r = _hardsigmoid(jnp.dot(xr, wr, precision=hp))
    ww = tf + k
    p = jnp.maximum(sp, ww)
    e1, e2 = jnp.exp(sp - p), jnp.exp(ww - p)
    a, b = e1 * sA + e2 * v, e1 * sB + e2
    ww2 = sp + ntd
    p2 = jnp.maximum(ww2, k)
    e1b, e2b = jnp.exp(ww2 - p2), jnp.exp(k - p2)
    nA, nB = e1b * sA + e2b * v, e1b * sB + e2b
    rwkv = jnp.dot(r * a / b, wo, precision=hp)
    return rwkv, nA, nB, p2, x


def _run_case(B, C, key):
    kx, kA, kB, kp, ksx, kparams = jax.random.split(key, 6)
    x = jax.random.normal(kx, (B, C), jnp.float32)
    state_A = jax.random.normal(kA, (B, C), jnp.float32) * 0.1
    state_B = jax.random.normal(kB, (B, C), jnp.float32) * 0.1 + 1.0
    state_p = jax.random.normal(kp, (B, C), jnp.float32) * 0.1
    state_x = jax.random.normal(ksx, (B, C), jnp.float32)
    params = init_params(kparams, C)

    outs = rwkv_timemix_for_quant(x, state_A, state_B, state_p, state_x, params)
    outs = jax.block_until_ready(outs)
    refs = reference_timemix(x, state_A, state_B, state_p, state_x, params)
    names = ("rwkv", "new_A", "new_B", "new_p", "new_x")
    for name, o, r in zip(names, outs, refs):
        assert jnp.allclose(o, r, atol=2e-2, rtol=2e-2), f"mismatch in {name} (B={B}, C={C})"


if __name__ == "__main__":
    key = jax.random.PRNGKey(0)
    k1, k2 = jax.random.split(key)
    # small shape consistent with the module (single grid step)
    _run_case(B=8, C=128, key=k1)
    # larger embedding: exercises the column-tiled grid + W_out accumulation path
    _run_case(B=8, C=1024, key=k2)
    print("KERNEL_OK")
</pallas_src>

<mosaic_0001>
module attributes {stable_mosaic.version = 11 : i64} {
  func.func @_timemix_kernel(%arg0: i32, %arg1: memref<8x128xf32, #tpu.memory_space<vmem>>, %arg2: memref<8x128xf32, #tpu.memory_space<vmem>>, %arg3: memref<8x128xf32, #tpu.memory_space<vmem>>, %arg4: memref<8x128xf32, #tpu.memory_space<vmem>>, %arg5: memref<8x128xf32, #tpu.memory_space<vmem>>, %arg6: memref<3x128xf32, #tpu.memory_space<vmem>>, %arg7: memref<2x128xf32, #tpu.memory_space<vmem>>, %arg8: memref<128x128xbf16, #tpu.memory_space<vmem>>, %arg9: memref<128x128xbf16, #tpu.memory_space<vmem>>, %arg10: memref<128x128xbf16, #tpu.memory_space<vmem>>, %arg11: memref<128x128xbf16, #tpu.memory_space<vmem>>, %arg12: memref<8x128xf32, #tpu.memory_space<vmem>>, %arg13: memref<8x128xf32, #tpu.memory_space<vmem>>, %arg14: memref<8x128xf32, #tpu.memory_space<vmem>>, %arg15: memref<8x128xf32, #tpu.memory_space<vmem>>) attributes {dimension_semantics = [#tpu.dimension_semantics<arbitrary>], iteration_bounds = array<i64: 1>, scalar_prefetch = 0 : i64, scratch_operands = 0 : i64, tpu.core_type = #tpu.core_type<tc>, window_params = [{pipeline_mode = #tpu.pipeline_mode<synchronous>, transform_indices = @transform_0, window_bounds = array<i64: 8, 128>}, {pipeline_mode = #tpu.pipeline_mode<synchronous>, transform_indices = @transform_1, window_bounds = array<i64: 8, 128>}, {transform_indices = @transform_2, window_bounds = array<i64: 8, 128>}, {transform_indices = @transform_3, window_bounds = array<i64: 8, 128>}, {transform_indices = @transform_4, window_bounds = array<i64: 8, 128>}, {pipeline_mode = #tpu.pipeline_mode<synchronous>, transform_indices = @transform_5, window_bounds = array<i64: 3, 128>}, {transform_indices = @transform_6, window_bounds = array<i64: 2, 128>}, {transform_indices = @transform_7, window_bounds = array<i64: 128, 128>}, {transform_indices = @transform_8, window_bounds = array<i64: 128, 128>}, {transform_indices = @transform_9, window_bounds = array<i64: 128, 128>}, {transform_indices = @transform_10, window_bounds = array<i64: 128, 128>}, {pipeline_mode = #tpu.pipeline_mode<synchronous>, transform_indices = @transform_11, window_bounds = array<i64: 8, 128>}, {transform_indices = @transform_12, window_bounds = array<i64: 8, 128>}, {transform_indices = @transform_13, window_bounds = array<i64: 8, 128>}, {transform_indices = @transform_14, window_bounds = array<i64: 8, 128>}]} {
    %c0 = arith.constant 0 : index
    %c0_0 = arith.constant 0 : index
    %0 = vector.load %arg1[%c0, %c0_0] : memref<8x128xf32, #tpu.memory_space<vmem>>, vector<8x128xf32>
    %c0_1 = arith.constant 0 : index
    %c0_2 = arith.constant 0 : index
    %1 = vector.load %arg2[%c0_1, %c0_2] : memref<8x128xf32, #tpu.memory_space<vmem>>, vector<8x128xf32>
    %c0_3 = arith.constant 0 : index
    %c0_4 = arith.constant 0 : index
    %2 = vector.load %arg6[%c0_3, %c0_4] : memref<3x128xf32, #tpu.memory_space<vmem>>, vector<3x128xf32>
    %3 = vector.extract_strided_slice %2 {offsets = [0, 0], sizes = [1, 128], strides = [1, 1]} : vector<3x128xf32> to vector<1x128xf32>
    %4 = vector.extract_strided_slice %2 {offsets = [1, 0], sizes = [1, 128], strides = [1, 1]} : vector<3x128xf32> to vector<1x128xf32>
    %5 = vector.extract_strided_slice %2 {offsets = [2, 0], sizes = [1, 128], strides = [1, 1]} : vector<3x128xf32> to vector<1x128xf32>
    %6 = vector.broadcast %3 : vector<1x128xf32> to vector<8x128xf32>
    %7 = arith.mulf %0, %6 : vector<8x128xf32>
    %cst = arith.constant 1.000000e+00 : f32
    %8 = vector.broadcast %cst : f32 to vector<1x128xf32>
    %9 = arith.subf %8, %3 : vector<1x128xf32>
    %10 = vector.broadcast %9 : vector<1x128xf32> to vector<8x128xf32>
    %11 = arith.mulf %1, %10 : vector<8x128xf32>
    %12 = arith.addf %7, %11 : vector<8x128xf32>
    %13 = vector.broadcast %4 : vector<1x128xf32> to vector<8x128xf32>
    %14 = arith.mulf %0, %13 : vector<8x128xf32>
    %cst_5 = arith.constant 1.000000e+00 : f32
    %15 = vector.broadcast %cst_5 : f32 to vector<1x128xf32>
    %16 = arith.subf %15, %4 : vector<1x128xf32>
    %17 = vector.broadcast %16 : vector<1x128xf32> to vector<8x128xf32>
    %18 = arith.mulf %1, %17 : vector<8x128xf32>
    %19 = arith.addf %14, %18 : vector<8x128xf32>
    %20 = vector.broadcast %5 : vector<1x128xf32> to vector<8x128xf32>
    %21 = arith.mulf %0, %20 : vector<8x128xf32>
    %cst_6 = arith.constant 1.000000e+00 : f32
    %22 = vector.broadcast %cst_6 : f32 to vector<1x128xf32>
    %23 = arith.subf %22, %5 : vector<1x128xf32>
    %24 = vector.broadcast %23 : vector<1x128xf32> to vector<8x128xf32>
    %25 = arith.mulf %1, %24 : vector<8x128xf32>
    %26 = arith.addf %21, %25 : vector<8x128xf32>
    %c0_7 = arith.constant 0 : index
    %c0_8 = arith.constant 0 : index
    %27 = vector.load %arg8[%c0_7, %c0_8] : memref<128x128xbf16, #tpu.memory_space<vmem>>, vector<128x128xbf16>
    %28 = arith.extf %27 : vector<128x128xbf16> to vector<128x128xf32>
    %cst_9 = arith.constant dense<0.000000e+00> : vector<8x128xf32>
    %29 = tpu.matmul %12, %28, %cst_9 {dimension_numbers = #tpu.dot_dimension_numbers<[1], [0], [0], [1], [0, 0, 1, 1], [], []>} : vector<8x128xf32>, vector<128x128xf32>, vector<8x128xf32> -> vector<8x128xf32>
    %c0_10 = arith.constant 0 : index
    %c0_11 = arith.constant 0 : index
    %30 = vector.load %arg9[%c0_10, %c0_11] : memref<128x128xbf16, #tpu.memory_space<vmem>>, vector<128x128xbf16>
    %31 = arith.extf %30 : vector<128x128xbf16> to vector<128x128xf32>
    %cst_12 = arith.constant dense<0.000000e+00> : vector<8x128xf32>
    %32 = tpu.matmul %19, %31, %cst_12 {dimension_numbers = #tpu.dot_dimension_numbers<[1], [0], [0], [1], [0, 0, 1, 1], [], []>} : vector<8x128xf32>, vector<128x128xf32>, vector<8x128xf32> -> vector<8x128xf32>
    %c0_13 = arith.constant 0 : index
    %c0_14 = arith.constant 0 : index
    %33 = vector.load %arg10[%c0_13, %c0_14] : memref<128x128xbf16, #tpu.memory_space<vmem>>, vector<128x128xbf16>
    %34 = arith.extf %33 : vector<128x128xbf16> to vector<128x128xf32>
    %cst_15 = arith.constant dense<0.000000e+00> : vector<8x128xf32>
    %35 = tpu.matmul %26, %34, %cst_15 {dimension_numbers = #tpu.dot_dimension_numbers<[1], [0], [0], [1], [0, 0, 1, 1], [], []>} : vector<8x128xf32>, vector<128x128xf32>, vector<8x128xf32> -> vector<8x128xf32>
    %cst_16 = arith.constant 0.166666672 : f32
    %36 = vector.broadcast %cst_16 : f32 to vector<8x128xf32>
    %37 = arith.mulf %35, %36 : vector<8x128xf32>
    %cst_17 = arith.constant 5.000000e-01 : f32
    %38 = vector.broadcast %cst_17 : f32 to vector<8x128xf32>
    %39 = arith.addf %37, %38 : vector<8x128xf32>
    %cst_18 = arith.constant 0.000000e+00 : f32
    %cst_19 = arith.constant 1.000000e+00 : f32
    %40 = vector.broadcast %cst_18 : f32 to vector<8x128xf32>
    %41 = arith.maximumf %40, %39 : vector<8x128xf32>
    %42 = vector.broadcast %cst_19 : f32 to vector<8x128xf32>
    %43 = arith.minimumf %42, %41 : vector<8x128xf32>
    %c0_20 = arith.constant 0 : index
    %c0_21 = arith.constant 0 : index
    %44 = vector.load %arg7[%c0_20, %c0_21] : memref<2x128xf32, #tpu.memory_space<vmem>>, vector<2x128xf32>
    %45 = vector.extract_strided_slice %44 {offsets = [0, 0], sizes = [1, 128], strides = [1, 1]} : vector<2x128xf32> to vector<1x128xf32>
    %46 = vector.extract_strided_slice %44 {offsets = [1, 0], sizes = [1, 128], strides = [1, 1]} : vector<2x128xf32> to vector<1x128xf32>
    %c0_22 = arith.constant 0 : index
    %c0_23 = arith.constant 0 : index
    %47 = vector.load %arg3[%c0_22, %c0_23] : memref<8x128xf32, #tpu.memory_space<vmem>>, vector<8x128xf32>
    %c0_24 = arith.constant 0 : index
    %c0_25 = arith.constant 0 : index
    %48 = vector.load %arg4[%c0_24, %c0_25] : memref<8x128xf32, #tpu.memory_space<vmem>>, vector<8x128xf32>
    %c0_26 = arith.constant 0 : index
    %c0_27 = arith.constant 0 : index
    %49 = vector.load %arg5[%c0_26, %c0_27] : memref<8x128xf32, #tpu.memory_space<vmem>>, vector<8x128xf32>
    %50 = vector.broadcast %45 : vector<1x128xf32> to vector<8x128xf32>
    %51 = arith.addf %50, %29 : vector<8x128xf32>
    %52 = arith.maximumf %49, %51 : vector<8x128xf32>
    %53 = arith.subf %49, %52 : vector<8x128xf32>
    %54 = math.exp %53 : vector<8x128xf32>
    %55 = arith.subf %51, %52 : vector<8x128xf32>
    %56 = math.exp %55 : vector<8x128xf32>
    %57 = arith.mulf %54, %47 : vector<8x128xf32>
    %58 = arith.mulf %56, %32 : vector<8x128xf32>
    %59 = arith.addf %57, %58 : vector<8x128xf32>
    %60 = arith.mulf %54, %48 : vector<8x128xf32>
    %61 = arith.addf %60, %56 : vector<8x128xf32>
    %62 = vector.broadcast %46 : vector<1x128xf32> to vector<8x128xf32>
    %63 = arith.addf %49, %62 : vector<8x128xf32>
    %64 = arith.maximumf %63, %29 : vector<8x128xf32>
    %65 = arith.subf %63, %64 : vector<8x128xf32>
    %66 = math.exp %65 : vector<8x128xf32>
    %67 = arith.subf %29, %64 : vector<8x128xf32>
    %68 = math.exp %67 : vector<8x128xf32>
    %69 = arith.mulf %66, %47 : vector<8x128xf32>
    %70 = arith.mulf %68, %32 : vector<8x128xf32>
    %71 = arith.addf %69, %70 : vector<8x128xf32>
    %c0_28 = arith.constant 0 : index
    %c0_29 = arith.constant 0 : index
    %72 = vector.load %arg13[%c0_28, %c0_29] : memref<8x128xf32, #tpu.memory_space<vmem>>, vector<8x128xf32>
    tpu.vector_store %arg13[%c0_28, %c0_29], %71 {strides = array<i32>} : memref<8x128xf32, #tpu.memory_space<vmem>>, vector<8x128xf32>,
    %73 = arith.mulf %66, %48 : vector<8x128xf32>
    %74 = arith.addf %73, %68 : vector<8x128xf32>
    %c0_30 = arith.constant 0 : index
    %c0_31 = arith.constant 0 : index
    %75 = vector.load %arg14[%c0_30, %c0_31] : memref<8x128xf32, #tpu.memory_space<vmem>>, vector<8x128xf32>
    tpu.vector_store %arg14[%c0_30, %c0_31], %74 {strides = array<i32>} : memref<8x128xf32, #tpu.memory_space<vmem>>, vector<8x128xf32>,
    %c0_32 = arith.constant 0 : index
    %c0_33 = arith.constant 0 : index
    %76 = vector.load %arg15[%c0_32, %c0_33] : memref<8x128xf32, #tpu.memory_space<vmem>>, vector<8x128xf32>
    tpu.vector_store %arg15[%c0_32, %c0_33], %64 {strides = array<i32>} : memref<8x128xf32, #tpu.memory_space<vmem>>, vector<8x128xf32>,
    %77 = arith.mulf %43, %59 : vector<8x128xf32>
    %78 = arith.divf %77, %61 : vector<8x128xf32>
    %c0_34 = arith.constant 0 : index
    %c0_35 = arith.constant 0 : index
    %79 = vector.load %arg11[%c0_34, %c0_35] : memref<128x128xbf16, #tpu.memory_space<vmem>>, vector<128x128xbf16>
    %80 = arith.extf %79 : vector<128x128xbf16> to vector<128x128xf32>
    %cst_36 = arith.constant dense<0.000000e+00> : vector<8x128xf32>
    %81 = tpu.matmul %78, %80, %cst_36 {dimension_numbers = #tpu.dot_dimension_numbers<[1], [0], [0], [1], [0, 0, 1, 1], [], []>} : vector<8x128xf32>, vector<128x128xf32>, vector<8x128xf32> -> vector<8x128xf32>
    %c0_i32 = arith.constant 0 : i32
    %82 = arith.cmpi eq, %arg0, %c0_i32 : i32
    %83 = arith.extui %82 : i1 to i32
    %c0_i32_37 = arith.constant 0 : i32
    %84 = arith.cmpi ne, %83, %c0_i32_37 : i32
    scf.if %84 {
      %c0_40 = arith.constant 0 : index
      %c0_41 = arith.constant 0 : index
      %88 = vector.load %arg12[%c0_40, %c0_41] : memref<8x128xf32, #tpu.memory_space<vmem>>, vector<8x128xf32>
      tpu.vector_store %arg12[%c0_40, %c0_41], %81 {strides = array<i32>} : memref<8x128xf32, #tpu.memory_space<vmem>>, vector<8x128xf32>,
    } else {
    }
    %c0_i32_38 = arith.constant 0 : i32
    %85 = arith.cmpi sgt, %arg0, %c0_i32_38 : i32
    %86 = arith.extui %85 : i1 to i32
    %c0_i32_39 = arith.constant 0 : i32
    %87 = arith.cmpi ne, %86, %c0_i32_39 : i32
    scf.if %87 {
      %c0_40 = arith.constant 0 : index
      %c0_41 = arith.constant 0 : index
      %88 = vector.load %arg12[%c0_40, %c0_41] : memref<8x128xf32, #tpu.memory_space<vmem>>, vector<8x128xf32>
      %89 = arith.addf %88, %81 : vector<8x128xf32>
      %c0_42 = arith.constant 0 : index
      %c0_43 = arith.constant 0 : index
      %90 = vector.load %arg12[%c0_42, %c0_43] : memref<8x128xf32, #tpu.memory_space<vmem>>, vector<8x128xf32>
      tpu.vector_store %arg12[%c0_42, %c0_43], %89 {strides = array<i32>} : memref<8x128xf32, #tpu.memory_space<vmem>>, vector<8x128xf32>,
    } else {
    }
    return
  }
  func.func @transform_0(%arg0: i32) -> (i32, i32) {
    %c0_i32 = arith.constant 0 : i32
    %c0_i32_0 = arith.constant 0 : i32
    %c0_i32_1 = arith.constant 0 : i32
    return %c0_i32, %c0_i32_0 : i32, i32
  }
  func.func @transform_1(%arg0: i32) -> (i32, i32) {
    %c0_i32 = arith.constant 0 : i32
    %c0_i32_0 = arith.constant 0 : i32
    %c0_i32_1 = arith.constant 0 : i32
    return %c0_i32, %c0_i32_0 : i32, i32
  }
  func.func @transform_2(%arg0: i32) -> (i32, i32) {
    %c0_i32 = arith.constant 0 : i32
    %c0_i32_0 = arith.constant 0 : i32
    return %c0_i32, %arg0 : i32, i32
  }
  func.func @transform_3(%arg0: i32) -> (i32, i32) {
    %c0_i32 = arith.constant 0 : i32
    %c0_i32_0 = arith.constant 0 : i32
    return %c0_i32, %arg0 : i32, i32
  }
  func.func @transform_4(%arg0: i32) -> (i32, i32) {
    %c0_i32 = arith.constant 0 : i32
    %c0_i32_0 = arith.constant 0 : i32
    return %c0_i32, %arg0 : i32, i32
  }
  func.func @transform_5(%arg0: i32) -> (i32, i32) {
    %c0_i32 = arith.constant 0 : i32
    %c0_i32_0 = arith.constant 0 : i32
    %c0_i32_1 = arith.constant 0 : i32
    return %c0_i32, %c0_i32_0 : i32, i32
  }
  func.func @transform_6(%arg0: i32) -> (i32, i32) {
    %c0_i32 = arith.constant 0 : i32
    %c0_i32_0 = arith.constant 0 : i32
    return %c0_i32, %arg0 : i32, i32
  }
  func.func @transform_7(%arg0: i32) -> (i32, i32) {
    %c0_i32 = arith.constant 0 : i32
    %c0_i32_0 = arith.constant 0 : i32
    return %c0_i32, %arg0 : i32, i32
  }
  func.func @transform_8(%arg0: i32) -> (i32, i32) {
    %c0_i32 = arith.constant 0 : i32
    %c0_i32_0 = arith.constant 0 : i32
    return %c0_i32, %arg0 : i32, i32
  }
  func.func @transform_9(%arg0: i32) -> (i32, i32) {
    %c0_i32 = arith.constant 0 : i32
    %c0_i32_0 = arith.constant 0 : i32
    return %c0_i32, %arg0 : i32, i32
  }
  func.func @transform_10(%arg0: i32) -> (i32, i32) {
    %c0_i32 = arith.constant 0 : i32
    %c0_i32_0 = arith.constant 0 : i32
    return %arg0, %c0_i32 : i32, i32
  }
  func.func @transform_11(%arg0: i32) -> (i32, i32) {
    %c0_i32 = arith.constant 0 : i32
    %c0_i32_0 = arith.constant 0 : i32
    %c0_i32_1 = arith.constant 0 : i32
    return %c0_i32, %c0_i32_0 : i32, i32
  }
  func.func @transform_12(%arg0: i32) -> (i32, i32) {
    %c0_i32 = arith.constant 0 : i32
    %c0_i32_0 = arith.constant 0 : i32
    return %c0_i32, %arg0 : i32, i32
  }
  func.func @transform_13(%arg0: i32) -> (i32, i32) {
    %c0_i32 = arith.constant 0 : i32
    %c0_i32_0 = arith.constant 0 : i32
    return %c0_i32, %arg0 : i32, i32
  }
  func.func @transform_14(%arg0: i32) -> (i32, i32) {
    %c0_i32 = arith.constant 0 : i32
    %c0_i32_0 = arith.constant 0 : i32
    return %c0_i32, %arg0 : i32, i32
  }
}

</mosaic_0001>

<llo_original>
// kernel: rwkv_timemix_for_quant.1
$region0: #{rwkv_timemix_for_quant.1}
  #allocation0 [shape = 'u32[]', space=smem, size = 0x4, offset = 0x4, fixed_abs, tag = 'smem constant byte address 0x4 - core index']
  #allocation1 [shape = 'u32[72,128]{1,0:T(1,128)}', space=vmem, size = 0x9000, scoped, tag = 'internal scratch']
  %s0 = inlined_call_operand.vmem [shape: f32[8,128], index: 0, kind: input, shape index: {}]
  %s1 = inlined_call_operand.vmem [shape: f32[8,128], index: 1, kind: input, shape index: {}]
  %s2 = inlined_call_operand.vmem [shape: f32[8,128], index: 2, kind: input, shape index: {}, may-alias: {2,12}]
  %s3 = inlined_call_operand.vmem [shape: f32[8,128], index: 3, kind: input, shape index: {}, may-alias: {3,13}]
  %s4 = inlined_call_operand.vmem [shape: f32[8,128], index: 4, kind: input, shape index: {}, may-alias: {4,14}]
  %s5 = inlined_call_operand.vmem [shape: f32[3,128], index: 5, kind: input, shape index: {}]
  %s6 = inlined_call_operand.vmem [shape: f32[2,128], index: 6, kind: input, shape index: {}]
  %s7 = inlined_call_operand.hbm [shape: bf16[128,128], index: 7, kind: input, shape index: {}]
  %s8 = inlined_call_operand.hbm [shape: bf16[128,128], index: 8, kind: input, shape index: {}]
  %s9 = inlined_call_operand.hbm [shape: bf16[128,128], index: 9, kind: input, shape index: {}]
  %s10 = inlined_call_operand.hbm [shape: bf16[128,128], index: 10, kind: input, shape index: {}]
  %s11 = inlined_call_operand.hbm [shape: f32[8,128], index: 11, kind: output, shape index: {0}]
  %s12 = inlined_call_operand.vmem [shape: f32[8,128], index: 12, kind: output, shape index: {1}, may-alias: {2,12}]
  %s13 = inlined_call_operand.vmem [shape: f32[8,128], index: 13, kind: output, shape index: {2}, may-alias: {3,13}]
  %s14 = inlined_call_operand.vmem [shape: f32[8,128], index: 14, kind: output, shape index: {3}, may-alias: {4,14}]
  %15 = xla_tuple %s11, %s12, %s13, %s14
  %s16 = sld [smem:[#allocation0]]
  $region102: #{rwkv_timemix_for_quant.1} parent=0
    _
  %s18 = ssub.s32 1, %s16
  %s19 = scalar_select 0, %s18, %s16
  $region1: #{rwkv_timemix_for_quant.1} parent=0
    #allocation2 [shape = 'u8[32768]{0}', space=vmem, size = 0x8000, scoped, tag = 'input window, operand 7, single buffered']
    #allocation3 [shape = 's32[1]{0}', space=sflag, size = 0x4, scoped, tag = 'scoped memory for rwkv_timemix_for_quant.1']
    #allocation4 [shape = 's32[1]{0}', space=sflag, size = 0x4, scoped, tag = 'scoped memory for rwkv_timemix_for_quant.1']
    #allocation5 [shape = 'u8[32768]{0}', space=vmem, size = 0x8000, scoped, tag = 'input window, operand 8, single buffered']
    #allocation6 [shape = 's32[1]{0}', space=sflag, size = 0x4, scoped, tag = 'scoped memory for rwkv_timemix_for_quant.1']
    #allocation7 [shape = 'u8[32768]{0}', space=vmem, size = 0x8000, scoped, tag = 'input window, operand 9, single buffered']
    #allocation8 [shape = 'u8[32768]{0}', space=vmem, size = 0x8000, scoped, tag = 'input window, operand 10, single buffered']
    #allocation9 [shape = 's32[1]{0}', space=sflag, size = 0x4, scoped, tag = 'scoped memory for rwkv_timemix_for_quant.1']
    #allocation10 [shape = 'u8[4096]{0}', space=vmem, size = 0x1000, scoped, tag = 'output window, operand 0, single buffered']
    %20 = vsyncpa [#allocation3], 0
    %21 = vsyncpa [#allocation6], 0
    %22 = vsyncpa [#allocation9], 0
    %23 = vsyncpa [#allocation4], 0
    // Predicated region
    $region2: #{rwkv_timemix_for_quant.1} parent=1 // pred_check
      _
    $region3: #{rwkv_timemix_for_quant.1} parent=1 // pred_check_branch
      %25 = sbr.rel (0) target = $region5
    $region4: #{rwkv_timemix_for_quant.1} parent=1 // pred_region
      _
    $region5: #{rwkv_timemix_for_quant.1} parent=1 // pred_fallthru
      _
    // Predicated region
    $region6: #{rwkv_timemix_for_quant.1} parent=1 // pred_check
      _
    $region7: #{rwkv_timemix_for_quant.1} parent=1 // pred_check_branch
      %27 = sbr.rel (0) target = $region9
    $region8: #{rwkv_timemix_for_quant.1} parent=1 // pred_region
      _
    $region9: #{rwkv_timemix_for_quant.1} parent=1 // pred_fallthru
      _
    // Predicated region
    $region10: #{rwkv_timemix_for_quant.1} parent=1 // pred_check
      _
    $region11: #{rwkv_timemix_for_quant.1} parent=1 // pred_check_branch
      %29 = sbr.rel (0) target = $region13
    $region12: #{rwkv_timemix_for_quant.1} parent=1 // pred_region
      _
    $region13: #{rwkv_timemix_for_quant.1} parent=1 // pred_fallthru
      _
    // Predicated region
    $region14: #{rwkv_timemix_for_quant.1} parent=1 // pred_check
      _
    $region15: #{rwkv_timemix_for_quant.1} parent=1 // pred_check_branch
      %31 = sbr.rel (0) target = $region17
    $region16: #{rwkv_timemix_for_quant.1} parent=1 // pred_region
      _
    $region17: #{rwkv_timemix_for_quant.1} parent=1 // pred_fallthru
      _
    // Predicated region
    $region18: #{rwkv_timemix_for_quant.1} parent=1 // pred_check
      _
    $region19: #{rwkv_timemix_for_quant.1} parent=1 // pred_check_branch
      %33 = sbr.rel (0) target = $region21
    $region20: #{rwkv_timemix_for_quant.1} parent=1 // pred_region
      _
    $region21: #{rwkv_timemix_for_quant.1} parent=1 // pred_fallthru
      _
    // Predicated region
    $region22: #{rwkv_timemix_for_quant.1} parent=1 // pred_check
      _
    $region23: #{rwkv_timemix_for_quant.1} parent=1 // pred_check_branch
      %35 = sbr.rel (0) target = $region25
    $region24: #{rwkv_timemix_for_quant.1} parent=1 // pred_region
      _
    $region25: #{rwkv_timemix_for_quant.1} parent=1 // pred_fallthru
      _
    // Predicated region
    $region26: #{rwkv_timemix_for_quant.1} parent=1 // pred_check
      _
    $region27: #{rwkv_timemix_for_quant.1} parent=1 // pred_check_branch
      %37 = sbr.rel (0) target = $region29
    $region28: #{rwkv_timemix_for_quant.1} parent=1 // pred_region
      _
    $region29: #{rwkv_timemix_for_quant.1} parent=1 // pred_fallthru
      _
    // Predicated region
    $region30: #{rwkv_timemix_for_quant.1} parent=1 // pred_check
      _
    $region31: #{rwkv_timemix_for_quant.1} parent=1 // pred_check_branch
      %39 = sbr.rel (0) target = $region33
    $region32: #{rwkv_timemix_for_quant.1} parent=1 // pred_region
      %41 = vsyncadd [#allocation3], 0
      %s42 = sshll.u32 %s7, 4
      %s43 = int_to_ptr.hbm [resolvable:$true] %s42
      %s44 = sshll.u32 [#allocation2], 4
      %s45 = int_to_ptr.vmem [resolvable:$true] %s44
      %50 = dma.hbm_to_vmem [thread:$0]  %s43, 1024, %s45, [#allocation3], 64, 64, 4
    $region33: #{rwkv_timemix_for_quant.1} parent=1 // pred_fallthru
      _
    // Predicated region
    $region34: #{rwkv_timemix_for_quant.1} parent=1 // pred_check
      _
    $region35: #{rwkv_timemix_for_quant.1} parent=1 // pred_check_branch
      %52 = sbr.rel (0) target = $region37
    $region36: #{rwkv_timemix_for_quant.1} parent=1 // pred_region
      %54 = vsyncadd [#allocation6], 0
      %s55 = sshll.u32 %s8, 4
      %s56 = int_to_ptr.hbm [resolvable:$true] %s55
      %s57 = sshll.u32 [#allocation5], 4
      %s58 = int_to_ptr.vmem [resolvable:$true] %s57
      %63 = dma.hbm_to_vmem [thread:$0]  %s56, 1024, %s58, [#allocation6], 64, 64, 4
    $region37: #{rwkv_timemix_for_quant.1} parent=1 // pred_fallthru
      _
    // Predicated region
    $region38: #{rwkv_timemix_for_quant.1} parent=1 // pred_check
      _
    $region39: #{rwkv_timemix_for_quant.1} parent=1 // pred_check_branch
      %65 = sbr.rel (0) target = $region41
    $region40: #{rwkv_timemix_for_quant.1} parent=1 // pred_region
      %67 = vsyncadd [#allocation6], 0
      %s68 = sshll.u32 %s9, 4
      %s69 = int_to_ptr.hbm [resolvable:$true] %s68
      %s70 = sshll.u32 [#allocation7], 4
      %s71 = int_to_ptr.vmem [resolvable:$true] %s70
      %76 = dma.hbm_to_vmem [thread:$0]  %s69, 1024, %s71, [#allocation6], 64, 64, 4
    $region41: #{rwkv_timemix_for_quant.1} parent=1 // pred_fallthru
      _
    // Predicated region
    $region42: #{rwkv_timemix_for_quant.1} parent=1 // pred_check
      _
    $region43: #{rwkv_timemix_for_quant.1} parent=1 // pred_check_branch
      %78 = sbr.rel (0) target = $region45
    $region44: #{rwkv_timemix_for_quant.1} parent=1 // pred_region
      %80 = vsyncadd [#allocation9], 0
      %s81 = sshll.u32 %s10, 4
      %s82 = int_to_ptr.hbm [resolvable:$true] %s81
      %s83 = sshll.u32 [#allocation8], 4
      %s84 = int_to_ptr.vmem [resolvable:$true] %s83
      %89 = dma.hbm_to_vmem [thread:$0]  %s82, 1024, %s84, [#allocation9], 64, 64, 4
    $region45: #{rwkv_timemix_for_quant.1} parent=1 // pred_fallthru
      _
    // Predicated region
    $region46: #{rwkv_timemix_for_quant.1} parent=1 // pred_check
      _
    $region47: #{rwkv_timemix_for_quant.1} parent=1 // pred_check_branch
      %91 = sbr.rel (0) target = $region49
    $region48: #{rwkv_timemix_for_quant.1} parent=1 // pred_region
      %93 = dma.done [#allocation3], 1024
    $region49: #{rwkv_timemix_for_quant.1} parent=1 // pred_fallthru
      _
    // Predicated region
    $region50: #{rwkv_timemix_for_quant.1} parent=1 // pred_check
      _
    $region51: #{rwkv_timemix_for_quant.1} parent=1 // pred_check_branch
      %95 = sbr.rel (0) target = $region53
    $region52: #{rwkv_timemix_for_quant.1} parent=1 // pred_region
      %97 = dma.done [#allocation6], 1024
    $region53: #{rwkv_timemix_for_quant.1} parent=1 // pred_fallthru
      _
    // Predicated region
    $region54: #{rwkv_timemix_for_quant.1} parent=1 // pred_check
      _
    $region55: #{rwkv_timemix_for_quant.1} parent=1 // pred_check_branch
      %99 = sbr.rel (0) target = $region57
    $region56: #{rwkv_timemix_for_quant.1} parent=1 // pred_region
      %101 = dma.done [#allocation6], 1024
    $region57: #{rwkv_timemix_for_quant.1} parent=1 // pred_fallthru
      _
    // Predicated region
    $region58: #{rwkv_timemix_for_quant.1} parent=1 // pred_check
      _
    $region59: #{rwkv_timemix_for_quant.1} parent=1 // pred_check_branch
      %103 = sbr.rel (0) target = $region61
    $region60: #{rwkv_timemix_for_quant.1} parent=1 // pred_region
      %105 = dma.done [#allocation9], 1024
    $region61: #{rwkv_timemix_for_quant.1} parent=1 // pred_fallthru
      _
    %v106 = vld [vmem:[%s0] sm:$0xff]
    %v107 = vld [vmem:[%s1] sm:$0xff]
    %v108 = vld [vmem:[%s5] sm:$0x7]
    %v109 = vperm.slane %v108, 0
    %v110 = vmul.f32 %v106, %v109
    %v111 = vsub.f32 1.0, %v108
    %v112 = vperm.slane %v111, 0
    %v113 = vmul.f32 %v107, %v112
    %v114 = vadd.f32 %v110, %v113
    %v115 = vperm.slane %v108, 1
    %v116 = vmul.f32 %v106, %v115
    %v117 = vperm.slane %v111, 1
    %v118 = vmul.f32 %v107, %v117
    %v119 = vadd.f32 %v116, %v118
    %v120 = vperm.slane %v108, 2
    %v121 = vmul.f32 %v106, %v120
    %v122 = vperm.slane %v111, 2
    %v123 = vmul.f32 %v107, %v122
    %v124 = vadd.f32 %v121, %v123
    %v125 = vld [vmem:[#allocation2] sm:$0xf]
    %v126 = vld [vmem:[#allocation2 + $0x4] sm:$0xf]
    %v127 = vld [vmem:[#allocation2 + $0x8] sm:$0xf]
    %v128 = vld [vmem:[#allocation2 + $0xc] sm:$0xf]
    %v129 = vld [vmem:[#allocation2 + $0x10] sm:$0xf]
    %v130 = vld [vmem:[#allocation2 + $0x14] sm:$0xf]
    %v131 = vld [vmem:[#allocation2 + $0x18] sm:$0xf]
    %v132 = vld [vmem:[#allocation2 + $0x1c] sm:$0xf]
    %v133 = vld [vmem:[#allocation2 + $0x20] sm:$0xf]
    %v134 = vld [vmem:[#allocation2 + $0x24] sm:$0xf]
    %v135 = vld [vmem:[#allocation2 + $0x28] sm:$0xf]
    %v136 = vld [vmem:[#allocation2 + $0x2c] sm:$0xf]
    %v137 = vld [vmem:[#allocation2 + $0x30] sm:$0xf]
    %v138 = vld [vmem:[#allocation2 + $0x34] sm:$0xf]
    %v139 = vld [vmem:[#allocation2 + $0x38] sm:$0xf]
    %v140 = vld [vmem:[#allocation2 + $0x3c] sm:$0xf]
    %v141 = vunpack.c.l.bf16 %v125
    %v142 = vunpack.c.l.bf16 %v126
    %v143 = vunpack.c.l.bf16 %v127
    %v144 = vunpack.c.l.bf16 %v128
    %v145 = vunpack.c.l.bf16 %v129
    %v146 = vunpack.c.l.bf16 %v130
    %v147 = vunpack.c.l.bf16 %v131
    %v148 = vunpack.c.l.bf16 %v132
    %v149 = vunpack.c.l.bf16 %v133
    %v150 = vunpack.c.l.bf16 %v134
    %v151 = vunpack.c.l.bf16 %v135
    %v152 = vunpack.c.l.bf16 %v136
    %v153 = vunpack.c.l.bf16 %v137
    %v154 = vunpack.c.l.bf16 %v138
    %v155 = vunpack.c.l.bf16 %v139
    %v156 = vunpack.c.l.bf16 %v140
    %157 = vmatpush.msra.mxu0 %v156
    %158 = vmatpush.msra.mxu0 %v155
    %159 = vmatpush.msra.mxu0 %v154
    %160 = vmatpush.msra.mxu0 %v153
    %161 = vmatpush.msra.mxu0 %v152
    %162 = vmatpush.msra.mxu0 %v151
    %163 = vmatpush.msra.mxu0 %v150
    %164 = vmatpush.msra.mxu0 %v149
    %165 = vmatpush.msra.mxu0 %v148
    %166 = vmatpush.msra.mxu0 %v147
    %167 = vmatpush.msra.mxu0 %v146
    %168 = vmatpush.msra.mxu0 %v145
    %169 = vmatpush.msra.mxu0 %v144
    %170 = vmatpush.msra.mxu0 %v143
    %171 = vmatpush.msra.mxu0 %v142
    %172 = vmatpush.msra.mxu0 %v141
    %173 = vmatmul.f32.gmra.mxu0 %v114
    %v174 = vpop.f32.mrf.mxu0
    %v175 = vadd.f32 0.0, %v174
    %176 = vdwg.mxu0
    %v177 = vld [vmem:[#allocation5] sm:$0xf]
    %v178 = vld [vmem:[#allocation5 + $0x4] sm:$0xf]
    %v179 = vld [vmem:[#allocation5 + $0x8] sm:$0xf]
    %v180 = vld [vmem:[#allocation5 + $0xc] sm:$0xf]
    %v181 = vld [vmem:[#allocation5 + $0x10] sm:$0xf]
    %v182 = vld [vmem:[#allocation5 + $0x14] sm:$0xf]
    %v183 = vld [vmem:[#allocation5 + $0x18] sm:$0xf]
    %v184 = vld [vmem:[#allocation5 + $0x1c] sm:$0xf]
    %v185 = vld [vmem:[#allocation5 + $0x20] sm:$0xf]
    %v186 = vld [vmem:[#allocation5 + $0x24] sm:$0xf]
    %v187 = vld [vmem:[#allocation5 + $0x28] sm:$0xf]
    %v188 = vld [vmem:[#allocation5 + $0x2c] sm:$0xf]
    %v189 = vld [vmem:[#allocation5 + $0x30] sm:$0xf]
    %v190 = vld [vmem:[#allocation5 + $0x34] sm:$0xf]
    %v191 = vld [vmem:[#allocation5 + $0x38] sm:$0xf]
    %v192 = vld [vmem:[#allocation5 + $0x3c] sm:$0xf]
    %v193 = vunpack.c.l.bf16 %v177
    %v194 = vunpack.c.l.bf16 %v178
    %v195 = vunpack.c.l.bf16 %v179
    %v196 = vunpack.c.l.bf16 %v180
    %v197 = vunpack.c.l.bf16 %v181
    %v198 = vunpack.c.l.bf16 %v182
    %v199 = vunpack.c.l.bf16 %v183
    %v200 = vunpack.c.l.bf16 %v184
    %v201 = vunpack.c.l.bf16 %v185
    %v202 = vunpack.c.l.bf16 %v186
    %v203 = vunpack.c.l.bf16 %v187
    %v204 = vunpack.c.l.bf16 %v188
    %v205 = vunpack.c.l.bf16 %v189
    %v206 = vunpack.c.l.bf16 %v190
    %v207 = vunpack.c.l.bf16 %v191
    %v208 = vunpack.c.l.bf16 %v192
    %209 = vmatpush.msra.mxu0 %v208
    %210 = vmatpush.msra.mxu0 %v207
    %211 = vmatpush.msra.mxu0 %v206
    %212 = vmatpush.msra.mxu0 %v205
    %213 = vmatpush.msra.mxu0 %v204
    %214 = vmatpush.msra.mxu0 %v203
    %215 = vmatpush.msra.mxu0 %v202
    %216 = vmatpush.msra.mxu0 %v201
    %217 = vmatpush.msra.mxu0 %v200
    %218 = vmatpush.msra.mxu0 %v199
    %219 = vmatpush.msra.mxu0 %v198
    %220 = vmatpush.msra.mxu0 %v197
    %221 = vmatpush.msra.mxu0 %v196
    %222 = vmatpush.msra.mxu0 %v195
    %223 = vmatpush.msra.mxu0 %v194
    %224 = vmatpush.msra.mxu0 %v193
    %225 = vmatmul.f32.gmra.mxu0 %v119
    %v226 = vpop.f32.mrf.mxu0
    %v227 = vadd.f32 0.0, %v226
    %228 = vdwg.mxu0
    %v229 = vld [vmem:[#allocation7] sm:$0xf]
    %v230 = vld [vmem:[#allocation7 + $0x4] sm:$0xf]
    %v231 = vld [vmem:[#allocation7 + $0x8] sm:$0xf]
    %v232 = vld [vmem:[#allocation7 + $0xc] sm:$0xf]
    %v233 = vld [vmem:[#allocation7 + $0x10] sm:$0xf]
    %v234 = vld [vmem:[#allocation7 + $0x14] sm:$0xf]
    %v235 = vld [vmem:[#allocation7 + $0x18] sm:$0xf]
    %v236 = vld [vmem:[#allocation7 + $0x1c] sm:$0xf]
    %v237 = vld [vmem:[#allocation7 + $0x20] sm:$0xf]
    %v238 = vld [vmem:[#allocation7 + $0x24] sm:$0xf]
    %v239 = vld [vmem:[#allocation7 + $0x28] sm:$0xf]
    %v240 = vld [vmem:[#allocation7 + $0x2c] sm:$0xf]
    %v241 = vld [vmem:[#allocation7 + $0x30] sm:$0xf]
    %v242 = vld [vmem:[#allocation7 + $0x34] sm:$0xf]
    %v243 = vld [vmem:[#allocation7 + $0x38] sm:$0xf]
    %v244 = vld [vmem:[#allocation7 + $0x3c] sm:$0xf]
    %v245 = vunpack.c.l.bf16 %v229
    %v246 = vunpack.c.l.bf16 %v230
    %v247 = vunpack.c.l.bf16 %v231
    %v248 = vunpack.c.l.bf16 %v232
    %v249 = vunpack.c.l.bf16 %v233
    %v250 = vunpack.c.l.bf16 %v234
    %v251 = vunpack.c.l.bf16 %v235
    %v252 = vunpack.c.l.bf16 %v236
    %v253 = vunpack.c.l.bf16 %v237
    %v254 = vunpack.c.l.bf16 %v238
    %v255 = vunpack.c.l.bf16 %v239
    %v256 = vunpack.c.l.bf16 %v240
    %v257 = vunpack.c.l.bf16 %v241
    %v258 = vunpack.c.l.bf16 %v242
    %v259 = vunpack.c.l.bf16 %v243
    %v260 = vunpack.c.l.bf16 %v244
    %261 = vmatpush.msra.mxu0 %v260
    %262 = vmatpush.msra.mxu0 %v259
    %263 = vmatpush.msra.mxu0 %v258
    %264 = vmatpush.msra.mxu0 %v257
    %265 = vmatpush.msra.mxu0 %v256
    %266 = vmatpush.msra.mxu0 %v255
    %267 = vmatpush.msra.mxu0 %v254
    %268 = vmatpush.msra.mxu0 %v253
    %269 = vmatpush.msra.mxu0 %v252
    %270 = vmatpush.msra.mxu0 %v251
    %271 = vmatpush.msra.mxu0 %v250
    %272 = vmatpush.msra.mxu0 %v249
    %273 = vmatpush.msra.mxu0 %v248
    %274 = vmatpush.msra.mxu0 %v247
    %275 = vmatpush.msra.mxu0 %v246
    %276 = vmatpush.msra.mxu0 %v245
    %277 = vmatmul.f32.gmra.mxu0 %v124
    %v278 = vpop.f32.mrf.mxu0
    %v279 = vadd.f32 0.0, %v278
    %280 = vdwg.mxu0
    %v281 = vmul.f32 %v279, 0.16666667
    %v282 = vadd.f32 %v281, 0.5
    %v283 = vmax.f32 %v282, 0.0
    %v284 = vmin.f32 %v283, 1.0
    %v285 = vld [vmem:[%s6] sm:$0x3]
    %v286 = vld [vmem:[%s2] sm:$0xff]
    %v287 = vld [vmem:[%s3] sm:$0xff]
    %v288 = vld [vmem:[%s4] sm:$0xff]
    %v289 = vperm.slane %v285, 0
    %v290 = vadd.f32 %v289, %v175
    %v291 = vmax.f32 %v288, %v290
    %v292 = vsub.f32 %v288, %v291
    %v293 = vmul.f32 %v292, 1.442695
    %v294 = vpow.pop %v293
    %v295 = vsub.f32 %v290, %v291
    %v296 = vmul.f32 %v295, 1.442695
    %v297 = vpow.pop %v296
    %v298 = vmul.f32 %v294, %v286
    %v299 = vmul.f32 %v297, %v227
    %v300 = vadd.f32 %v298, %v299
    %v301 = vmul.f32 %v294, %v287
    %v302 = vadd.f32 %v301, %v297
    %v303 = vperm.slane %v285, 1
    %v304 = vadd.f32 %v288, %v303
    %v305 = vmax.f32 %v304, %v175
    %v306 = vsub.f32 %v304, %v305
    %v307 = vmul.f32 %v306, 1.442695
    %v308 = vpow.pop %v307
    %v309 = vsub.f32 %v175, %v305
    %v310 = vmul.f32 %v309, 1.442695
    %v311 = vpow.pop %v310
    %v312 = vmul.f32 %v308, %v286
    %v313 = vmul.f32 %v311, %v227
    %v314 = vadd.f32 %v312, %v313
    %315 = vst [vmem:[%s12] sm:$0xff] %v314
    %v316 = vmul.f32 %v308, %v287
    %v317 = vadd.f32 %v316, %v311
    %318 = vst [vmem:[%s13] sm:$0xff] %v317
    %319 = vst [vmem:[%s14] sm:$0xff] %v305
    %v320 = vmul.f32 %v284, %v300
    %v321 = vrcp.pop %v302
    %v322 = vmul.f32 %v302, %v321
    %v323 = vsub.f32 1.0, %v322
    %v324 = vmul.f32 %v321, %v323
    %v325 = vadd.f32 %v321, %v324
    %vm326 = vweird.f32 %v302
    %vm327 = vweird.f32 %v321
    %vm328 = vmor %vm326, %vm327
    %v329 = vsel %vm328, %v321, %v325
    %v330 = vand.u32 2147483647, %v302
    %vm331 = vcmp.eq.f32.partialorder %v330, 8.507059e+37
    %v332 = vand.u32 %v302, 2147483648
    %v333 = vor.u32 1.1754944e-38, %v332
    %v334 = vsel %vm331, %v333, %v329
    %v335 = vmul.f32 %v320, %v334
    %v336 = vld [vmem:[#allocation8] sm:$0xf]
    %v337 = vld [vmem:[#allocation8 + $0x4] sm:$0xf]
    %v338 = vld [vmem:[#allocation8 + $0x8] sm:$0xf]
    %v339 = vld [vmem:[#allocation8 + $0xc] sm:$0xf]
    %v340 = vld [vmem:[#allocation8 + $0x10] sm:$0xf]
    %v341 = vld [vmem:[#allocation8 + $0x14] sm:$0xf]
    %v342 = vld [vmem:[#allocation8 + $0x18] sm:$0xf]
    %v343 = vld [vmem:[#allocation8 + $0x1c] sm:$0xf]
    %v344 = vld [vmem:[#allocation8 + $0x20] sm:$0xf]
    %v345 = vld [vmem:[#allocation8 + $0x24] sm:$0xf]
    %v346 = vld [vmem:[#allocation8 + $0x28] sm:$0xf]
    %v347 = vld [vmem:[#allocation8 + $0x2c] sm:$0xf]
    %v348 = vld [vmem:[#allocation8 + $0x30] sm:$0xf]
    %v349 = vld [vmem:[#allocation8 + $0x34] sm:$0xf]
    %v350 = vld [vmem:[#allocation8 + $0x38] sm:$0xf]
    %v351 = vld [vmem:[#allocation8 + $0x3c] sm:$0xf]
    %v352 = vunpack.c.l.bf16 %v336
    %v353 = vunpack.c.l.bf16 %v337
    %v354 = vunpack.c.l.bf16 %v338
    %v355 = vunpack.c.l.bf16 %v339
    %v356 = vunpack.c.l.bf16 %v340
    %v357 = vunpack.c.l.bf16 %v341
    %v358 = vunpack.c.l.bf16 %v342
    %v359 = vunpack.c.l.bf16 %v343
    %v360 = vunpack.c.l.bf16 %v344
    %v361 = vunpack.c.l.bf16 %v345
    %v362 = vunpack.c.l.bf16 %v346
    %v363 = vunpack.c.l.bf16 %v347
    %v364 = vunpack.c.l.bf16 %v348
    %v365 = vunpack.c.l.bf16 %v349
    %v366 = vunpack.c.l.bf16 %v350
    %v367 = vunpack.c.l.bf16 %v351
    %368 = vmatpush.msra.mxu0 %v367
    %369 = vmatpush.msra.mxu0 %v366
    %370 = vmatpush.msra.mxu0 %v365
    %371 = vmatpush.msra.mxu0 %v364
    %372 = vmatpush.msra.mxu0 %v363
    %373 = vmatpush.msra.mxu0 %v362
    %374 = vmatpush.msra.mxu0 %v361
    %375 = vmatpush.msra.mxu0 %v360
    %376 = vmatpush.msra.mxu0 %v359
    %377 = vmatpush.msra.mxu0 %v358
    %378 = vmatpush.msra.mxu0 %v357
    %379 = vmatpush.msra.mxu0 %v356
    %380 = vmatpush.msra.mxu0 %v355
    %381 = vmatpush.msra.mxu0 %v354
    %382 = vmatpush.msra.mxu0 %v353
    %383 = vmatpush.msra.mxu0 %v352
    %384 = vmatmul.f32.gmra.mxu0 %v335
    %v385 = vpop.f32.mrf.mxu0
    %v386 = vadd.f32 0.0, %v385
    %387 = vdwg.mxu0
    %p388 = scmp.eq.s32.totalorder 0, 0
    // Predicated region
    $region62: #{rwkv_timemix_for_quant.1} parent=1 // pred_check
      %p389 = pneg %p388
    $region63: #{rwkv_timemix_for_quant.1} parent=1 // pred_check_branch
      %391 = sbr.rel (%p389) target = $region65
    $region64: #{rwkv_timemix_for_quant.1} parent=1 // pred_region
      %392 = vst [vmem:[#allocation10] sm:$0xff] %v386
    $region65: #{rwkv_timemix_for_quant.1} parent=1 // pred_fallthru
      _
    %p393 = scmp.gt.s32.totalorder 0, 0
    // Predicated region
    $region66: #{rwkv_timemix_for_quant.1} parent=1 // pred_check
      %p394 = pneg %p393
    $region67: #{rwkv_timemix_for_quant.1} parent=1 // pred_check_branch
      %396 = sbr.rel (%p394) target = $region69
    $region68: #{rwkv_timemix_for_quant.1} parent=1 // pred_region
      %v397 = vld [vmem:[#allocation10] sm:$0xff]
      %v398 = vadd.f32 %v397, %v386
      %399 = vst [vmem:[#allocation10] sm:$0xff] %v398
    $region69: #{rwkv_timemix_for_quant.1} parent=1 // pred_fallthru
      _
    // Predicated region
    $region70: #{rwkv_timemix_for_quant.1} parent=1 // pred_check
      _
    $region71: #{rwkv_timemix_for_quant.1} parent=1 // pred_check_branch
      %401 = sbr.rel (0) target = $region73
    $region72: #{rwkv_timemix_for_quant.1} parent=1 // pred_region
      %403 = vsyncadd [#allocation4], 0
      %s405 = sshll.u32 [#allocation10], 4
      %s406 = int_to_ptr.vmem [resolvable:$true] %s405
      %s407 = sshll.u32 %s11, 4
      %s408 = int_to_ptr.hbm [resolvable:$true] %s407
      %410 = dma.vmem_to_hbm [thread:$0]  %s406, 128, %s408, [#allocation4]
    $region73: #{rwkv_timemix_for_quant.1} parent=1 // pred_fallthru
      _
    // Predicated region
    $region74: #{rwkv_timemix_for_quant.1} parent=1 // pred_check
      _
    $region75: #{rwkv_timemix_for_quant.1} parent=1 // pred_check_branch
      %412 = sbr.rel (0) target = $region77
    $region76: #{rwkv_timemix_for_quant.1} parent=1 // pred_region
      _
    $region77: #{rwkv_timemix_for_quant.1} parent=1 // pred_fallthru
      _
    // Predicated region
    $region78: #{rwkv_timemix_for_quant.1} parent=1 // pred_check
      _
    $region79: #{rwkv_timemix_for_quant.1} parent=1 // pred_check_branch
      %414 = sbr.rel (0) target = $region81
    $region80: #{rwkv_timemix_for_quant.1} parent=1 // pred_region
      _
    $region81: #{rwkv_timemix_for_quant.1} parent=1 // pred_fallthru
      _
    // Predicated region
    $region82: #{rwkv_timemix_for_quant.1} parent=1 // pred_check
      _
    $region83: #{rwkv_timemix_for_quant.1} parent=1 // pred_check_branch
      %416 = sbr.rel (0) target = $region85
    $region84: #{rwkv_timemix_for_quant.1} parent=1 // pred_region
      _
    $region85: #{rwkv_timemix_for_quant.1} parent=1 // pred_fallthru
      _
    // Predicated region
    $region86: #{rwkv_timemix_for_quant.1} parent=1 // pred_check
      _
    $region87: #{rwkv_timemix_for_quant.1} parent=1 // pred_check_branch
      %418 = sbr.rel (0) target = $region89
    $region88: #{rwkv_timemix_for_quant.1} parent=1 // pred_region
      %420 = dma.done [#allocation4], 128
    $region89: #{rwkv_timemix_for_quant.1} parent=1 // pred_fallthru
      _
    // Predicated region
    $region90: #{rwkv_timemix_for_quant.1} parent=1 // pred_check
      _
    $region91: #{rwkv_timemix_for_quant.1} parent=1 // pred_check_branch
      %422 = sbr.rel (0) target = $region93
    $region92: #{rwkv_timemix_for_quant.1} parent=1 // pred_region
      _
    $region93: #{rwkv_timemix_for_quant.1} parent=1 // pred_fallthru
      _
    // Predicated region
    $region94: #{rwkv_timemix_for_quant.1} parent=1 // pred_check
      _
    $region95: #{rwkv_timemix_for_quant.1} parent=1 // pred_check_branch
      %424 = sbr.rel (0) target = $region97
    $region96: #{rwkv_timemix_for_quant.1} parent=1 // pred_region
      _
    $region97: #{rwkv_timemix_for_quant.1} parent=1 // pred_fallthru
      _
    // Predicated region
    $region98: #{rwkv_timemix_for_quant.1} parent=1 // pred_check
      _
    $region99: #{rwkv_timemix_for_quant.1} parent=1 // pred_check_branch
      %426 = sbr.rel (0) target = $region101
    $region100: #{rwkv_timemix_for_quant.1} parent=1 // pred_region
      _
    $region101: #{rwkv_timemix_for_quant.1} parent=1 // pred_fallthru
      _
    %427 = vsyncpa [#allocation3], 1
    %428 = vsyncpa [#allocation6], 1
    %429 = vsyncpa [#allocation9], 1
    %430 = vsyncpa [#allocation4], 1

</llo_original>
